<compile_context>
chip_gen: v7x
topology: tpu7x:2x2x1
jax: 0.10.0
libtpu: 0.0.40
codegen_flags: <defaults>
</compile_context>

<pallas_src>
import functools

import jax
import jax.numpy as jnp
from jax import lax
from jax.experimental import pallas as pl
from jax.experimental.pallas import tpu as pltpu

# Loss hyper-parameters (module defaults).
A = 0.04
B = 3.0
C = 4.0
SQUARE = True

LANE = 128          # lane width (last dim of every block)
STRIP_R = 512       # rows per in-kernel compute strip (256 KiB f32 per temp)
TILE_R_MAX = 8192   # rows per DMA block: 4 MiB f32 per input per buffer


def _round_up(x, m):
    return (x + m - 1) // m * m


def _is_multicore_tc():
    """True on chips with >1 TensorCore sharing the grid (TPU v7x)."""
    try:
        kind = jax.devices()[0].device_kind.lower()
    except Exception:
        return False
    return "v7" in kind


def _strip_loss_sum(o, t, mask_row0, total_rows):
    """Loss terms for one (strip_r, LANE) strip, reduced to an (8, LANE) vreg.

    If mask_row0 is not None, rows with global index >= total_rows are zeroed
    via a jnp.where select on mse (NaN-safe w.r.t. stale VMEM in partial
    blocks).
    """
    o = o.astype(jnp.float32)
    t = t.astype(jnp.float32)
    strip_r = o.shape[0]

    diff = o - t
    d = diff * diff if SQUARE else jnp.abs(diff)
    # one select + one mul instead of mul-on-full-tensor + select
    pen = d * jnp.where(t >= 0.0, jnp.float32(C), jnp.float32(1.0))

    prod = o * t
    # denom >= A = 0.04, approx EUP reciprocal error (~1e-3 rel) is negligible
    f = prod * pl.reciprocal(jnp.abs(prod) + jnp.float32(A), approx=True)
    # 1 + 1/exp(g), g = B*(exp(f)-1)  ==  1 + exp(B - B*exp(f))
    mse = pen * (1.0 + jnp.exp(jnp.float32(B) - jnp.float32(B) * jnp.exp(f)))

    if mask_row0 is not None:
        row_ids = lax.broadcasted_iota(jnp.int32, (strip_r, LANE), 0) + mask_row0
        mse = jnp.where(row_ids < total_rows, mse, jnp.float32(0.0))

    # Summing over the leading axis of the (strip_r//8, 8, 128) view is pure
    # VALU adds across vregs; the single cross-lane reduce happens once,
    # outside the kernel.
    return mse.reshape(strip_r // 8, 8, LANE).sum(axis=0)


def _loss_kernel(o_ref, t_ref, psum_ref, *, tile_r, strip_r, steps,
                 total_rows, needs_mask):
    p = pl.program_id(0)          # parallel / core axis
    i = pl.program_id(1)          # arbitrary (reduction) axis

    @pl.when(i == 0)
    def _():
        psum_ref[...] = jnp.zeros_like(psum_ref)

    block_idx = p * steps + i     # unclamped; the index_map clamps the DMA
    n_strips = tile_r // strip_r

    def accumulate(masked):
        block_row0 = block_idx * tile_r if masked else None

        def one_strip(off, mask_row0):
            o = o_ref[pl.ds(off, strip_r), :]
            t = t_ref[pl.ds(off, strip_r), :]
            return _strip_loss_sum(o, t, mask_row0, total_rows)

        if n_strips == 1:
            psum_ref[...] += one_strip(0, block_row0)
        else:
            def body(s, acc):
                off = pl.multiple_of(s * strip_r, strip_r)
                mask_row0 = (block_row0 + s * strip_r) if masked else None
                return acc + one_strip(off, mask_row0)

            acc = lax.fori_loop(0, n_strips, body,
                                jnp.zeros((8, LANE), jnp.float32))
            psum_ref[...] += acc

    if needs_mask:
        # Mask hoisted off the hot path: only the tail block (and a possible
        # clamped duplicate block on the multi-core grid) pays for the
        # iota + select; pl.when cold paths are skipped at runtime.
        block_is_full = (block_idx + 1) * tile_r <= total_rows

        @pl.when(block_is_full)
        def _():
            accumulate(masked=False)

        @pl.when(jnp.logical_not(block_is_full))
        def _():
            accumulate(masked=True)
    else:
        accumulate(masked=False)


def positive_limit_space_focused_loss(output, target, *, multi_core=None):
    """Mean PositiveLimitSpaceFocusedLoss over all elements (any shape)."""
    assert output.shape == target.shape
    total_n = int(output.size)
    assert total_n > 0

    o = jnp.reshape(output, (-1,))
    t = jnp.reshape(target, (-1,))

    # Lane-align the flat view.  Zero padding contributes exactly 0 to the sum
    # (o == t == 0 -> pen == 0); the mean divides by the true element count.
    # TODO(synk): lane-misaligned inputs take a wrapper-side jnp.pad (one extra
    # HBM pass); an in-kernel flat-element-index mask would avoid it.
    padded = _round_up(total_n, LANE)
    if padded != total_n:
        o = jnp.pad(o, (0, padded - total_n))
        t = jnp.pad(t, (0, padded - total_n))

    rows = padded // LANE
    o = jnp.reshape(o, (rows, LANE))
    t = jnp.reshape(t, (rows, LANE))

    if multi_core is None:
        multi_core = _is_multicore_tc()
    npar = 2 if multi_core else 1     # 2 only on v7x (2 TensorCores)

    # Big DMA tile (amortizes per-step pipeline overhead), fixed small compute
    # strip (bounds elementwise intermediates in VMEM).
    if rows <= STRIP_R:
        tile_r = _round_up(rows, 8)
        strip_r = tile_r
    else:
        tile_r = min(TILE_R_MAX, _round_up(rows, STRIP_R))
        strip_r = STRIP_R

    total_blocks = pl.cdiv(rows, tile_r)
    steps = pl.cdiv(total_blocks, npar)
    needs_mask = (rows % tile_r != 0) or (total_blocks % npar != 0)

    def idx_map(p, i):
        # Clamp so no DMA targets a block fully past the array; the in-kernel
        # mask zeroes any duplicated / padded contribution.
        return (jnp.minimum(p * steps + i, total_blocks - 1), 0)

    kernel = functools.partial(
        _loss_kernel,
        tile_r=tile_r,
        strip_r=strip_r,
        steps=steps,
        total_rows=rows,
        needs_mask=needs_mask,
    )

    nbuf = 3 if multi_core else 2     # deeper input pipelining on v7x only
    spec_kwargs = {"pipeline_mode": pl.Buffered(nbuf)} if nbuf != 2 else {}
    in_spec = pl.BlockSpec((tile_r, LANE), idx_map, **spec_kwargs)

    in_block_bytes = tile_r * LANE * o.dtype.itemsize
    # 2 inputs x nbuf buffers + headroom for strip-sized temps; well under the
    # physical VMEM of v5e/v6e (128 MiB) and v7x (64 MiB).
    vmem_limit = int(max(2 * nbuf * in_block_bytes + (12 << 20), 32 << 20))

    semantics = (pltpu.CORE_PARALLEL if npar > 1 else "arbitrary", "arbitrary")

    partials = pl.pallas_call(
        kernel,
        out_shape=jax.ShapeDtypeStruct((npar * 8, LANE), jnp.float32),
        grid_spec=pltpu.PrefetchScalarGridSpec(
            num_scalar_prefetch=0,
            grid=(npar, steps),
            in_specs=[in_spec, in_spec],
            out_specs=pl.BlockSpec((8, LANE), lambda p, i: (p, 0)),
        ),
        compiler_params=pltpu.CompilerParams(
            dimension_semantics=semantics,
            vmem_limit_bytes=vmem_limit,
        ),
        cost_estimate=pl.CostEstimate(
            flops=15 * total_n,
            transcendentals=3 * total_n,
            bytes_accessed=2 * total_n * output.dtype.itemsize
                           + npar * 8 * LANE * 4,
        ),
    )(o, t)

    # Tiny epilogue: cross-lane reduce of npar * (8, 128) partials and the mean.
    return jnp.sum(partials) / jnp.float32(total_n)


def _reference(output, target):
    output = output.astype(jnp.float32)
    target = target.astype(jnp.float32)
    diff = output - target
    d = jnp.square(diff) if SQUARE else jnp.abs(diff)
    pen = jnp.where(target >= 0.0, C * d, d)
    prod = output * target
    f = prod / (jnp.abs(prod) + A)
    g = B * (jnp.exp(f) - 1.0)
    return jnp.mean(pen * (1.0 + 1.0 / jnp.exp(g)))


def _run_case(shape, k_out, k_tgt):
    out = jax.random.normal(k_out, shape, dtype=jnp.float32)
    tgt = jax.random.normal(k_tgt, shape, dtype=jnp.float32)
    try:
        loss = positive_limit_space_focused_loss(out, tgt)
        loss = jax.block_until_ready(loss)
    except Exception:
        # TODO(synk): multi-core (CORE_PARALLEL / Buffered(3)) v7x path not
        # supported on this chip/jax build; fall back to single-core config.
        loss = positive_limit_space_focused_loss(out, tgt, multi_core=False)
        loss = jax.block_until_ready(loss)
    ref = _reference(out, tgt)
    # Approx EUP reciprocal => ~1e-3 relative deviation budget.
    assert jnp.allclose(loss, ref, rtol=5e-3, atol=1e-6), (shape, loss, ref)


if __name__ == "__main__":
    shapes = [
        (2, 4, 16, 16),     # lane-aligned, single strip, no mask
        (2, 4, 128, 128),   # multi-strip fori_loop path
        (3, 5, 41),         # lane-misaligned -> pad fallback + masked tail
        (16, 256, 320),     # multi-block accumulation + partial tail block
    ]
    keys = jax.random.split(jax.random.PRNGKey(0), 2 * len(shapes))
    for n, shape in enumerate(shapes):
        _run_case(shape, keys[2 * n], keys[2 * n + 1])
    print("KERNEL_OK")
</pallas_src>

<mosaic_0001>
module attributes {stable_mosaic.version = 11 : i64} {
  func.func @_loss_kernel(%arg0: i32, %arg1: i32, %arg2: memref<16x128xf32, #tpu.memory_space<vmem>>, %arg3: memref<16x128xf32, #tpu.memory_space<vmem>>, %arg4: memref<8x128xf32, #tpu.memory_space<vmem>>) attributes {dimension_semantics = [#tpu.dimension_semantics<arbitrary>, #tpu.dimension_semantics<arbitrary>], iteration_bounds = array<i64: 1, 1>, scalar_prefetch = 0 : i64, scratch_operands = 0 : i64, tpu.core_type = #tpu.core_type<tc>, window_params = [{transform_indices = @transform_0, window_bounds = array<i64: 16, 128>}, {transform_indices = @transform_1, window_bounds = array<i64: 16, 128>}, {transform_indices = @transform_2, window_bounds = array<i64: 8, 128>}]} {
    %c0_i32 = arith.constant 0 : i32
    %0 = arith.cmpi eq, %arg1, %c0_i32 : i32
    %1 = arith.extui %0 : i1 to i32
    %c0_i32_0 = arith.constant 0 : i32
    %2 = arith.cmpi ne, %1, %c0_i32_0 : i32
    scf.if %2 {
      %cst_15 = arith.constant 0.000000e+00 : f32
      %33 = vector.broadcast %cst_15 : f32 to vector<8x128xf32>
      %c0_16 = arith.constant 0 : index
      %c0_17 = arith.constant 0 : index
      %34 = vector.load %arg4[%c0_16, %c0_17] : memref<8x128xf32, #tpu.memory_space<vmem>>, vector<8x128xf32>
      tpu.vector_store %arg4[%c0_16, %c0_17], %33 {strides = array<i32>} : memref<8x128xf32, #tpu.memory_space<vmem>>, vector<8x128xf32>,
    } else {
    }
    %c0 = arith.constant 0 : index
    %c0_1 = arith.constant 0 : index
    %3 = vector.load %arg4[%c0, %c0_1] : memref<8x128xf32, #tpu.memory_space<vmem>>, vector<8x128xf32>
    %c0_2 = arith.constant 0 : index
    %c0_3 = arith.constant 0 : index
    %4 = vector.load %arg2[%c0_2, %c0_3] : memref<16x128xf32, #tpu.memory_space<vmem>>, vector<16x128xf32>
    %c0_4 = arith.constant 0 : index
    %c0_5 = arith.constant 0 : index
    %5 = vector.load %arg3[%c0_4, %c0_5] : memref<16x128xf32, #tpu.memory_space<vmem>>, vector<16x128xf32>
    %6 = arith.subf %4, %5 : vector<16x128xf32>
    %7 = arith.mulf %6, %6 : vector<16x128xf32>
    %cst = arith.constant 0.000000e+00 : f32
    %8 = vector.broadcast %cst : f32 to vector<16x128xf32>
    %9 = arith.cmpf oge, %5, %8 : vector<16x128xf32>
    %cst_6 = arith.constant 4.000000e+00 : f32
    %cst_7 = arith.constant 1.000000e+00 : f32
    %10 = vector.broadcast %cst_6 : f32 to vector<16x128xf32>
    %11 = vector.broadcast %cst_7 : f32 to vector<16x128xf32>
    %12 = arith.select %9, %10, %11 : vector<16x128xi1>, vector<16x128xf32>
    %13 = arith.mulf %7, %12 : vector<16x128xf32>
    %14 = arith.mulf %4, %5 : vector<16x128xf32>
    %15 = math.absf %14 : vector<16x128xf32>
    %cst_8 = arith.constant 4.000000e-02 : f32
    %16 = vector.broadcast %cst_8 : f32 to vector<16x128xf32>
    %17 = arith.addf %15, %16 : vector<16x128xf32>
    %18 = tpu.reciprocal %17 {approx = true} : vector<16x128xf32> -> vector<16x128xf32>
    %19 = arith.mulf %14, %18 : vector<16x128xf32>
    %20 = math.exp %19 : vector<16x128xf32>
    %cst_9 = arith.constant 3.000000e+00 : f32
    %21 = vector.broadcast %cst_9 : f32 to vector<16x128xf32>
    %22 = arith.mulf %21, %20 : vector<16x128xf32>
    %cst_10 = arith.constant 3.000000e+00 : f32
    %23 = vector.broadcast %cst_10 : f32 to vector<16x128xf32>
    %24 = arith.subf %23, %22 : vector<16x128xf32>
    %25 = math.exp %24 : vector<16x128xf32>
    %cst_11 = arith.constant 1.000000e+00 : f32
    %26 = vector.broadcast %cst_11 : f32 to vector<16x128xf32>
    %27 = arith.addf %26, %25 : vector<16x128xf32>
    %28 = arith.mulf %13, %27 : vector<16x128xf32>
    %29 = vector.shape_cast %28 : vector<16x128xf32> to vector<2x8x128xf32>
    %cst_12 = arith.constant dense<0.000000e+00> : vector<8x128xf32>
    %30 = vector.multi_reduction <add>, %29, %cst_12 [0] : vector<2x8x128xf32> to vector<8x128xf32>
    %31 = arith.addf %3, %30 : vector<8x128xf32>
    %c0_13 = arith.constant 0 : index
    %c0_14 = arith.constant 0 : index
    %32 = vector.load %arg4[%c0_13, %c0_14] : memref<8x128xf32, #tpu.memory_space<vmem>>, vector<8x128xf32>
    tpu.vector_store %arg4[%c0_13, %c0_14], %31 {strides = array<i32>} : memref<8x128xf32, #tpu.memory_space<vmem>>, vector<8x128xf32>,
    return
  }
  func.func @transform_0(%arg0: i32, %arg1: i32) -> (i32, i32) {
    %c1_i32 = arith.constant 1 : i32
    %0 = arith.muli %arg0, %c1_i32 : i32
    %1 = arith.addi %0, %arg1 : i32
    %c0_i32 = arith.constant 0 : i32
    %2 = arith.minsi %1, %c0_i32 : i32
    %c0_i32_0 = arith.constant 0 : i32
    %c0_i32_1 = arith.constant 0 : i32
    return %2, %c0_i32_0 : i32, i32
  }
  func.func @transform_1(%arg0: i32, %arg1: i32) -> (i32, i32) {
    %c1_i32 = arith.constant 1 : i32
    %0 = arith.muli %arg0, %c1_i32 : i32
    %1 = arith.addi %0, %arg1 : i32
    %c0_i32 = arith.constant 0 : i32
    %2 = arith.minsi %1, %c0_i32 : i32
    %c0_i32_0 = arith.constant 0 : i32
    %c0_i32_1 = arith.constant 0 : i32
    return %2, %c0_i32_0 : i32, i32
  }
  func.func @transform_2(%arg0: i32, %arg1: i32) -> (i32, i32) {
    %c0_i32 = arith.constant 0 : i32
    %c0_i32_0 = arith.constant 0 : i32
    return %arg0, %c0_i32 : i32, i32
  }
}

module attributes {stable_mosaic.version = 11 : i64} {
  func.func @_loss_kernel(%arg0: i32, %arg1: i32, %arg2: memref<16x128xf32, #tpu.memory_space<vmem>>, %arg3: memref<16x128xf32, #tpu.memory_space<vmem>>, %arg4: memref<8x128xf32, #tpu.memory_space<vmem>>) attributes {dimension_semantics = [#tpu.dimension_semantics<arbitrary>, #tpu.dimension_semantics<arbitrary>], iteration_bounds = array<i64: 1, 1>, scalar_prefetch = 0 : i64, scratch_operands = 0 : i64, tpu.core_type = #tpu.core_type<tc>, window_params = [{transform_indices = @transform_0, window_bounds = array<i64: 16, 128>}, {transform_indices = @transform_1, window_bounds = array<i64: 16, 128>}, {transform_indices = @transform_2, window_bounds = array<i64: 8, 128>}]} {
    %c0_i32 = arith.constant 0 : i32
    %0 = arith.cmpi eq, %arg1, %c0_i32 : i32
    %1 = arith.extui %0 : i1 to i32
    %c0_i32_0 = arith.constant 0 : i32
    %2 = arith.cmpi ne, %1, %c0_i32_0 : i32
    scf.if %2 {
      %cst_15 = arith.constant 0.000000e+00 : f32
      %33 = vector.broadcast %cst_15 : f32 to vector<8x128xf32>
      %c0_16 = arith.constant 0 : index
      %c0_17 = arith.constant 0 : index
      %34 = vector.load %arg4[%c0_16, %c0_17] : memref<8x128xf32, #tpu.memory_space<vmem>>, vector<8x128xf32>
      tpu.vector_store %arg4[%c0_16, %c0_17], %33 {strides = array<i32>} : memref<8x128xf32, #tpu.memory_space<vmem>>, vector<8x128xf32>,
    } else {
    }
    %c0 = arith.constant 0 : index
    %c0_1 = arith.constant 0 : index
    %3 = vector.load %arg4[%c0, %c0_1] : memref<8x128xf32, #tpu.memory_space<vmem>>, vector<8x128xf32>
    %c0_2 = arith.constant 0 : index
    %c0_3 = arith.constant 0 : index
    %4 = vector.load %arg2[%c0_2, %c0_3] : memref<16x128xf32, #tpu.memory_space<vmem>>, vector<16x128xf32>
    %c0_4 = arith.constant 0 : index
    %c0_5 = arith.constant 0 : index
    %5 = vector.load %arg3[%c0_4, %c0_5] : memref<16x128xf32, #tpu.memory_space<vmem>>, vector<16x128xf32>
    %6 = arith.subf %4, %5 : vector<16x128xf32>
    %7 = arith.mulf %6, %6 : vector<16x128xf32>
    %cst = arith.constant 0.000000e+00 : f32
    %8 = vector.broadcast %cst : f32 to vector<16x128xf32>
    %9 = arith.cmpf oge, %5, %8 : vector<16x128xf32>
    %cst_6 = arith.constant 4.000000e+00 : f32
    %cst_7 = arith.constant 1.000000e+00 : f32
    %10 = vector.broadcast %cst_6 : f32 to vector<16x128xf32>
    %11 = vector.broadcast %cst_7 : f32 to vector<16x128xf32>
    %12 = arith.select %9, %10, %11 : vector<16x128xi1>, vector<16x128xf32>
    %13 = arith.mulf %7, %12 : vector<16x128xf32>
    %14 = arith.mulf %4, %5 : vector<16x128xf32>
    %15 = math.absf %14 : vector<16x128xf32>
    %cst_8 = arith.constant 4.000000e-02 : f32
    %16 = vector.broadcast %cst_8 : f32 to vector<16x128xf32>
    %17 = arith.addf %15, %16 : vector<16x128xf32>
    %18 = tpu.reciprocal %17 {approx = true} : vector<16x128xf32> -> vector<16x128xf32>
    %19 = arith.mulf %14, %18 : vector<16x128xf32>
    %20 = math.exp %19 : vector<16x128xf32>
    %cst_9 = arith.constant 3.000000e+00 : f32
    %21 = vector.broadcast %cst_9 : f32 to vector<16x128xf32>
    %22 = arith.mulf %21, %20 : vector<16x128xf32>
    %cst_10 = arith.constant 3.000000e+00 : f32
    %23 = vector.broadcast %cst_10 : f32 to vector<16x128xf32>
    %24 = arith.subf %23, %22 : vector<16x128xf32>
    %25 = math.exp %24 : vector<16x128xf32>
    %cst_11 = arith.constant 1.000000e+00 : f32
    %26 = vector.broadcast %cst_11 : f32 to vector<16x128xf32>
    %27 = arith.addf %26, %25 : vector<16x128xf32>
    %28 = arith.mulf %13, %27 : vector<16x128xf32>
    %29 = vector.shape_cast %28 : vector<16x128xf32> to vector<2x8x128xf32>
    %cst_12 = arith.constant dense<0.000000e+00> : vector<8x128xf32>
    %30 = vector.multi_reduction <add>, %29, %cst_12 [0] : vector<2x8x128xf32> to vector<8x128xf32>
    %31 = arith.addf %3, %30 : vector<8x128xf32>
    %c0_13 = arith.constant 0 : index
    %c0_14 = arith.constant 0 : index
    %32 = vector.load %arg4[%c0_13, %c0_14] : memref<8x128xf32, #tpu.memory_space<vmem>>, vector<8x128xf32>
    tpu.vector_store %arg4[%c0_13, %c0_14], %31 {strides = array<i32>} : memref<8x128xf32, #tpu.memory_space<vmem>>, vector<8x128xf32>,
    return
  }
  func.func @transform_0(%arg0: i32, %arg1: i32) -> (i32, i32) {
    %c1_i32 = arith.constant 1 : i32
    %0 = arith.muli %arg0, %c1_i32 : i32
    %1 = arith.addi %0, %arg1 : i32
    %c0_i32 = arith.constant 0 : i32
    %2 = arith.minsi %1, %c0_i32 : i32
    %c0_i32_0 = arith.constant 0 : i32
    %c0_i32_1 = arith.constant 0 : i32
    return %2, %c0_i32_0 : i32, i32
  }
  func.func @transform_1(%arg0: i32, %arg1: i32) -> (i32, i32) {
    %c1_i32 = arith.constant 1 : i32
    %0 = arith.muli %arg0, %c1_i32 : i32
    %1 = arith.addi %0, %arg1 : i32
    %c0_i32 = arith.constant 0 : i32
    %2 = arith.minsi %1, %c0_i32 : i32
    %c0_i32_0 = arith.constant 0 : i32
    %c0_i32_1 = arith.constant 0 : i32
    return %2, %c0_i32_0 : i32, i32
  }
  func.func @transform_2(%arg0: i32, %arg1: i32) -> (i32, i32) {
    %c0_i32 = arith.constant 0 : i32
    %c0_i32_0 = arith.constant 0 : i32
    return %arg0, %c0_i32 : i32, i32
  }
}

</mosaic_0001>

<llo_original>
// kernel: tpu_custom_call.1
$region0: #{tpu_custom_call.1}
  #allocation0 [shape = 'u32[]', space=smem, size = 0x4, offset = 0x4, fixed_abs, tag = 'smem constant byte address 0x4 - core index']
  #allocation1 [shape = 'u32[144,128]{1,0:T(1,128)}', space=vmem, size = 0x12000, scoped, tag = 'internal scratch']
  %s0 = inlined_call_operand.hbm [shape: f32[16,128], index: 0, kind: input, shape index: {}]
  %s1 = inlined_call_operand.hbm [shape: f32[16,128], index: 1, kind: input, shape index: {}]
  %s2 = inlined_call_operand.hbm [shape: f32[8,128], index: 2, kind: output, shape index: {}]
  %s3 = sld [smem:[#allocation0]]
  $region30: #{tpu_custom_call.1} parent=0
    _
  %s5 = ssub.s32 1, %s3
  %s6 = scalar_select 0, %s5, %s3
  $region1: #{tpu_custom_call.1} parent=0
    #allocation2 [shape = 'u8[8192]{0}', space=vmem, size = 0x2000, scoped, tag = 'input window, operand 0, single buffered']
    #allocation3 [shape = 's32[1]{0}', space=sflag, size = 0x4, scoped, tag = 'scoped memory for tpu_custom_call.1']
    #allocation4 [shape = 's32[1]{0}', space=sflag, size = 0x4, scoped, tag = 'scoped memory for tpu_custom_call.1']
    #allocation5 [shape = 'u8[8192]{0}', space=vmem, size = 0x2000, scoped, tag = 'input window, operand 1, single buffered']
    #allocation6 [shape = 's32[1]{0}', space=sflag, size = 0x4, scoped, tag = 'scoped memory for tpu_custom_call.1']
    #allocation7 [shape = 'u8[4096]{0}', space=vmem, size = 0x1000, scoped, tag = 'output window, operand 0, single buffered']
    %7 = vsyncpa [#allocation3], 0
    %8 = vsyncpa [#allocation6], 0
    %9 = vsyncpa [#allocation4], 0
    // Predicated region
    $region2: #{tpu_custom_call.1} parent=1 // pred_check
      _
    $region3: #{tpu_custom_call.1} parent=1 // pred_check_branch
      %11 = sbr.rel (0) target = $region5
    $region4: #{tpu_custom_call.1} parent=1 // pred_region
      %s12 = sadd.s32 0, 0
      %p13 = scmp.lt.s32.totalorder %s12, 0
      %s14 = scalar_select %p13, %s12, 0
      %s15 = smul.u32 2, %s14
      %s17 = ssub.s32 256, 256
      %18 = vsyncadd [#allocation3], %s17
      %s19 = smul.addr %s15, 128
      %s20 = scalar_lea.hbm %s0, %s19
      %s21 = sshll.u32 [#allocation2], 4
      %s22 = int_to_ptr.vmem [resolvable:$true] %s21
      %27 = dma.hbm_to_vmem [thread:$0]  %s20, 256, %s22, [#allocation3], 128, 128, 8
    $region5: #{tpu_custom_call.1} parent=1 // pred_fallthru
      _
    // Predicated region
    $region6: #{tpu_custom_call.1} parent=1 // pred_check
      _
    $region7: #{tpu_custom_call.1} parent=1 // pred_check_branch
      %29 = sbr.rel (0) target = $region9
    $region8: #{tpu_custom_call.1} parent=1 // pred_region
      %s30 = sadd.s32 0, 0
      %p31 = scmp.lt.s32.totalorder %s30, 0
      %s32 = scalar_select %p31, %s30, 0
      %s33 = smul.u32 2, %s32
      %s35 = ssub.s32 256, 256
      %36 = vsyncadd [#allocation6], %s35
      %s37 = smul.addr %s33, 128
      %s38 = scalar_lea.hbm %s1, %s37
      %s39 = sshll.u32 [#allocation5], 4
      %s40 = int_to_ptr.vmem [resolvable:$true] %s39
      %45 = dma.hbm_to_vmem [thread:$0]  %s38, 256, %s40, [#allocation6], 128, 128, 8
    $region9: #{tpu_custom_call.1} parent=1 // pred_fallthru
      _
    // Predicated region
    $region10: #{tpu_custom_call.1} parent=1 // pred_check
      _
    $region11: #{tpu_custom_call.1} parent=1 // pred_check_branch
      %47 = sbr.rel (0) target = $region13
    $region12: #{tpu_custom_call.1} parent=1 // pred_region
      %48 = dma.done [#allocation3], 256
    $region13: #{tpu_custom_call.1} parent=1 // pred_fallthru
      _
    // Predicated region
    $region14: #{tpu_custom_call.1} parent=1 // pred_check
      _
    $region15: #{tpu_custom_call.1} parent=1 // pred_check_branch
      %50 = sbr.rel (0) target = $region17
    $region16: #{tpu_custom_call.1} parent=1 // pred_region
      %51 = dma.done [#allocation6], 256
    $region17: #{tpu_custom_call.1} parent=1 // pred_fallthru
      _
    %s52 = sadd.s32 0, 0
    %p53 = scmp.lt.s32.totalorder %s52, 0
    %s54 = scalar_select %p53, %s52, 0
    %s55 = smul.u32 2, %s54
    %s56 = sadd.s32 0, 0
    %p57 = scmp.lt.s32.totalorder %s56, 0
    %s58 = scalar_select %p57, %s56, 0
    %s59 = smul.u32 2, %s58
    %p60 = scmp.eq.s32.totalorder 0, 0
    // Predicated region
    $region18: #{tpu_custom_call.1} parent=1 // pred_check
      %p61 = pneg %p60
    $region19: #{tpu_custom_call.1} parent=1 // pred_check_branch
      %63 = sbr.rel (%p61) target = $region21
    $region20: #{tpu_custom_call.1} parent=1 // pred_region
      %64 = vst [vmem:[#allocation7] sm:$0xff] 0.0
    $region21: #{tpu_custom_call.1} parent=1 // pred_fallthru
      _
    %v65 = vld [vmem:[#allocation7] sm:$0xff]
    %v66 = vld [vmem:[#allocation2] sm:$0xff]
    %v67 = vld [vmem:[#allocation2 + $0x8] sm:$0xff]
    %v68 = vld [vmem:[#allocation5] sm:$0xff]
    %v69 = vld [vmem:[#allocation5 + $0x8] sm:$0xff]
    %v70 = vsub.f32 %v66, %v68
    %v71 = vsub.f32 %v67, %v69
    %v72 = vmul.f32 %v70, %v70
    %v73 = vmul.f32 %v71, %v71
    %vm74 = vcmp.ge.f32.partialorder %v68, 0.0
    %vm75 = vcmp.ge.f32.partialorder %v69, 0.0
    %v76 = vsel %vm74, 4.0, 1.0
    %v77 = vsel %vm75, 4.0, 1.0
    %v78 = vmul.f32 %v72, %v76
    %v79 = vmul.f32 %v73, %v77
    %v80 = vmul.f32 %v66, %v68
    %v81 = vmul.f32 %v67, %v69
    %v82 = vand.u32 2147483647, %v80
    %v83 = vand.u32 2147483647, %v81
    %v84 = vadd.f32 %v82, 0.04
    %v85 = vadd.f32 %v83, 0.04
    %v86 = vrcp.pop %v84
    %v87 = vrcp.pop %v85
    %v88 = vmul.f32 %v80, %v86
    %v89 = vmul.f32 %v81, %v87
    %v90 = vmul.f32 %v88, 1.442695
    %v91 = vpow.pop %v90
    %v92 = vmul.f32 %v89, 1.442695
    %v93 = vpow.pop %v92
    %v94 = vmul.f32 %v91, 3.0
    %v95 = vmul.f32 %v93, 3.0
    %v96 = vsub.f32 3.0, %v94
    %v97 = vsub.f32 3.0, %v95
    %v98 = vmul.f32 %v96, 1.442695
    %v99 = vpow.pop %v98
    %v100 = vmul.f32 %v97, 1.442695
    %v101 = vpow.pop %v100
    %v102 = vadd.f32 %v99, 1.0
    %v103 = vadd.f32 %v101, 1.0
    %v104 = vmul.f32 %v78, %v102
    %v105 = vmul.f32 %v79, %v103
    %v106 = vadd.f32 %v104, %v105
    %v107 = vadd.f32 %v65, %v106
    %108 = vst [vmem:[#allocation7] sm:$0xff] %v107
    // Predicated region
    $region22: #{tpu_custom_call.1} parent=1 // pred_check
      _
    $region23: #{tpu_custom_call.1} parent=1 // pred_check_branch
      %110 = sbr.rel (0) target = $region25
    $region24: #{tpu_custom_call.1} parent=1 // pred_region
      %s112 = ssub.s32 128, 128
      %113 = vsyncadd [#allocation4], %s112
      %s115 = sshll.u32 [#allocation7], 4
      %s116 = int_to_ptr.vmem [resolvable:$true] %s115
      %118 = dma.vmem_to_hbm [thread:$0]  %s116, 128, %s2, [#allocation4]
    $region25: #{tpu_custom_call.1} parent=1 // pred_fallthru
      _
    // Predicated region
    $region26: #{tpu_custom_call.1} parent=1 // pred_check
      _
    $region27: #{tpu_custom_call.1} parent=1 // pred_check_branch
      %120 = sbr.rel (0) target = $region29
    $region28: #{tpu_custom_call.1} parent=1 // pred_region
      %121 = dma.done [#allocation4], 128
    $region29: #{tpu_custom_call.1} parent=1 // pred_fallthru
      _
    %122 = vsyncpa [#allocation3], 1
    %123 = vsyncpa [#allocation6], 1
    %124 = vsyncpa [#allocation4], 1

// kernel: tpu_custom_call.1
$region0: #{tpu_custom_call.1}
  #allocation0 [shape = 'u32[]', space=smem, size = 0x4, offset = 0x4, fixed_abs, tag = 'smem constant byte address 0x4 - core index']
  #allocation1 [shape = 'u32[144,128]{1,0:T(1,128)}', space=vmem, size = 0x12000, scoped, tag = 'internal scratch']
  %s0 = inlined_call_operand.hbm [shape: f32[16,128], index: 0, kind: input, shape index: {}]
  %s1 = inlined_call_operand.hbm [shape: f32[16,128], index: 1, kind: input, shape index: {}]
  %s2 = inlined_call_operand.hbm [shape: f32[8,128], index: 2, kind: output, shape index: {}]
  %s3 = sld [smem:[#allocation0]]
  $region30: #{tpu_custom_call.1} parent=0
    _
  %s5 = ssub.s32 1, %s3
  %s6 = scalar_select 0, %s5, %s3
  $region1: #{tpu_custom_call.1} parent=0
    #allocation2 [shape = 'u8[8192]{0}', space=vmem, size = 0x2000, scoped, tag = 'input window, operand 0, single buffered']
    #allocation3 [shape = 's32[1]{0}', space=sflag, size = 0x4, scoped, tag = 'scoped memory for tpu_custom_call.1']
    #allocation4 [shape = 's32[1]{0}', space=sflag, size = 0x4, scoped, tag = 'scoped memory for tpu_custom_call.1']
    #allocation5 [shape = 'u8[8192]{0}', space=vmem, size = 0x2000, scoped, tag = 'input window, operand 1, single buffered']
    #allocation6 [shape = 's32[1]{0}', space=sflag, size = 0x4, scoped, tag = 'scoped memory for tpu_custom_call.1']
    #allocation7 [shape = 'u8[4096]{0}', space=vmem, size = 0x1000, scoped, tag = 'output window, operand 0, single buffered']
    %7 = vsyncpa [#allocation3], 0
    %8 = vsyncpa [#allocation6], 0
    %9 = vsyncpa [#allocation4], 0
    // Predicated region
    $region2: #{tpu_custom_call.1} parent=1 // pred_check
      _
    $region3: #{tpu_custom_call.1} parent=1 // pred_check_branch
      %11 = sbr.rel (0) target = $region5
    $region4: #{tpu_custom_call.1} parent=1 // pred_region
      %s12 = sadd.s32 0, 0
      %p13 = scmp.lt.s32.totalorder %s12, 0
      %s14 = scalar_select %p13, %s12, 0
      %s15 = smul.u32 2, %s14
      %s17 = ssub.s32 256, 256
      %18 = vsyncadd [#allocation3], %s17
      %s19 = smul.addr %s15, 128
      %s20 = scalar_lea.hbm %s0, %s19
      %s21 = sshll.u32 [#allocation2], 4
      %s22 = int_to_ptr.vmem [resolvable:$true] %s21
      %27 = dma.hbm_to_vmem [thread:$0]  %s20, 256, %s22, [#allocation3], 128, 128, 8
    $region5: #{tpu_custom_call.1} parent=1 // pred_fallthru
      _
    // Predicated region
    $region6: #{tpu_custom_call.1} parent=1 // pred_check
      _
    $region7: #{tpu_custom_call.1} parent=1 // pred_check_branch
      %29 = sbr.rel (0) target = $region9
    $region8: #{tpu_custom_call.1} parent=1 // pred_region
      %s30 = sadd.s32 0, 0
      %p31 = scmp.lt.s32.totalorder %s30, 0
      %s32 = scalar_select %p31, %s30, 0
      %s33 = smul.u32 2, %s32
      %s35 = ssub.s32 256, 256
      %36 = vsyncadd [#allocation6], %s35
      %s37 = smul.addr %s33, 128
      %s38 = scalar_lea.hbm %s1, %s37
      %s39 = sshll.u32 [#allocation5], 4
      %s40 = int_to_ptr.vmem [resolvable:$true] %s39
      %45 = dma.hbm_to_vmem [thread:$0]  %s38, 256, %s40, [#allocation6], 128, 128, 8
    $region9: #{tpu_custom_call.1} parent=1 // pred_fallthru
      _
    // Predicated region
    $region10: #{tpu_custom_call.1} parent=1 // pred_check
      _
    $region11: #{tpu_custom_call.1} parent=1 // pred_check_branch
      %47 = sbr.rel (0) target = $region13
    $region12: #{tpu_custom_call.1} parent=1 // pred_region
      %48 = dma.done [#allocation3], 256
    $region13: #{tpu_custom_call.1} parent=1 // pred_fallthru
      _
    // Predicated region
    $region14: #{tpu_custom_call.1} parent=1 // pred_check
      _
    $region15: #{tpu_custom_call.1} parent=1 // pred_check_branch
      %50 = sbr.rel (0) target = $region17
    $region16: #{tpu_custom_call.1} parent=1 // pred_region
      %51 = dma.done [#allocation6], 256
    $region17: #{tpu_custom_call.1} parent=1 // pred_fallthru
      _
    %s52 = sadd.s32 0, 0
    %p53 = scmp.lt.s32.totalorder %s52, 0
    %s54 = scalar_select %p53, %s52, 0
    %s55 = smul.u32 2, %s54
    %s56 = sadd.s32 0, 0
    %p57 = scmp.lt.s32.totalorder %s56, 0
    %s58 = scalar_select %p57, %s56, 0
    %s59 = smul.u32 2, %s58
    %p60 = scmp.eq.s32.totalorder 0, 0
    // Predicated region
    $region18: #{tpu_custom_call.1} parent=1 // pred_check
      %p61 = pneg %p60
    $region19: #{tpu_custom_call.1} parent=1 // pred_check_branch
      %63 = sbr.rel (%p61) target = $region21
    $region20: #{tpu_custom_call.1} parent=1 // pred_region
      %64 = vst [vmem:[#allocation7] sm:$0xff] 0.0
    $region21: #{tpu_custom_call.1} parent=1 // pred_fallthru
      _
    %v65 = vld [vmem:[#allocation7] sm:$0xff]
    %v66 = vld [vmem:[#allocation2] sm:$0xff]
    %v67 = vld [vmem:[#allocation2 + $0x8] sm:$0xff]
    %v68 = vld [vmem:[#allocation5] sm:$0xff]
    %v69 = vld [vmem:[#allocation5 + $0x8] sm:$0xff]
    %v70 = vsub.f32 %v66, %v68
    %v71 = vsub.f32 %v67, %v69
    %v72 = vmul.f32 %v70, %v70
    %v73 = vmul.f32 %v71, %v71
    %vm74 = vcmp.ge.f32.partialorder %v68, 0.0
    %vm75 = vcmp.ge.f32.partialorder %v69, 0.0
    %v76 = vsel %vm74, 4.0, 1.0
    %v77 = vsel %vm75, 4.0, 1.0
    %v78 = vmul.f32 %v72, %v76
    %v79 = vmul.f32 %v73, %v77
    %v80 = vmul.f32 %v66, %v68
    %v81 = vmul.f32 %v67, %v69
    %v82 = vand.u32 2147483647, %v80
    %v83 = vand.u32 2147483647, %v81
    %v84 = vadd.f32 %v82, 0.04
    %v85 = vadd.f32 %v83, 0.04
    %v86 = vrcp.pop %v84
    %v87 = vrcp.pop %v85
    %v88 = vmul.f32 %v80, %v86
    %v89 = vmul.f32 %v81, %v87
    %v90 = vmul.f32 %v88, 1.442695
    %v91 = vpow.pop %v90
    %v92 = vmul.f32 %v89, 1.442695
    %v93 = vpow.pop %v92
    %v94 = vmul.f32 %v91, 3.0
    %v95 = vmul.f32 %v93, 3.0
    %v96 = vsub.f32 3.0, %v94
    %v97 = vsub.f32 3.0, %v95
    %v98 = vmul.f32 %v96, 1.442695
    %v99 = vpow.pop %v98
    %v100 = vmul.f32 %v97, 1.442695
    %v101 = vpow.pop %v100
    %v102 = vadd.f32 %v99, 1.0
    %v103 = vadd.f32 %v101, 1.0
    %v104 = vmul.f32 %v78, %v102
    %v105 = vmul.f32 %v79, %v103
    %v106 = vadd.f32 %v104, %v105
    %v107 = vadd.f32 %v65, %v106
    %108 = vst [vmem:[#allocation7] sm:$0xff] %v107
    // Predicated region
    $region22: #{tpu_custom_call.1} parent=1 // pred_check
      _
    $region23: #{tpu_custom_call.1} parent=1 // pred_check_branch
      %110 = sbr.rel (0) target = $region25
    $region24: #{tpu_custom_call.1} parent=1 // pred_region
      %s112 = ssub.s32 128, 128
      %113 = vsyncadd [#allocation4], %s112
      %s115 = sshll.u32 [#allocation7], 4
      %s116 = int_to_ptr.vmem [resolvable:$true] %s115
      %118 = dma.vmem_to_hbm [thread:$0]  %s116, 128, %s2, [#allocation4]
    $region25: #{tpu_custom_call.1} parent=1 // pred_fallthru
      _
    // Predicated region
    $region26: #{tpu_custom_call.1} parent=1 // pred_check
      _
    $region27: #{tpu_custom_call.1} parent=1 // pred_check_branch
      %120 = sbr.rel (0) target = $region29
    $region28: #{tpu_custom_call.1} parent=1 // pred_region
      %121 = dma.done [#allocation4], 128
    $region29: #{tpu_custom_call.1} parent=1 // pred_fallthru
      _
    %122 = vsyncpa [#allocation3], 1
    %123 = vsyncpa [#allocation6], 1
    %124 = vsyncpa [#allocation4], 1

</llo_original>
